<compile_context>
chip_gen: v7x
topology: tpu7x:2x2x1
jax: 0.10.0
libtpu: 0.0.40
codegen_flags: <defaults>
</compile_context>

<pallas_src>
import functools

import jax
import jax.numpy as jnp
from jax.experimental import pallas as pl
from jax.experimental.pallas import tpu as pltpu


_OUT_LANES = 128                       # lane-dense output width
_DBUF_INPUT_BUDGET = 8 * 1024 * 1024   # double-buffered input bytes per step
_MAX_TILE_ROWS = 1024                  # bound per-step compute working set


def _pick_tile_n(N, H, D, itemsize):
    """Largest multiple-of-8 divisor of N whose double-buffered footprint fits."""
    per_row = 2 * 6 * H * D * itemsize          # 6*H operands, 2 buffers each
    max_rows = min(_MAX_TILE_ROWS, max(8, _DBUF_INPUT_BUDGET // per_row))
    if N % 8 != 0 or N <= max_rows:
        # Block's second-to-last dim must be a multiple of 8 OR the full dim.
        # TODO(synk): mask-and-tile for huge N that is not a multiple of 8.
        return N
    best = 8
    for cand in range(8, int(min(N, max_rows)) + 1, 8):
        if N % cand == 0:
            best = cand
    return best


def _make_kernel(H):
    """Kernel over 6*H (tile_n, D) input refs with per-head per-lane accumulators."""

    def kernel(*refs):
        in_refs = refs[: 6 * H]
        out_ref = refs[6 * H]            # (1, H, 128) f32
        rank_acc = refs[6 * H + 1]       # (H, D) f32 VMEM scratch
        mse_acc = refs[6 * H + 2]        # (H, D) f32 VMEM scratch

        i = pl.program_id(1)             # position along the reduction axis

        @pl.when(i == 0)
        def _init():
            rank_acc[...] = jnp.zeros_like(rank_acc)
            mse_acc[...] = jnp.zeros_like(mse_acc)

        # Heads are few; keeping the loop inside the (small) N-tile means only
        # one head's six tiles are live at a time.
        for h in range(H):
            p_in = in_refs[0 * H + h][...].astype(jnp.float32)
            p_tgt = in_refs[1 * H + h][...].astype(jnp.float32)
            n_in = in_refs[2 * H + h][...].astype(jnp.float32)
            n_tgt = in_refs[3 * H + h][...].astype(jnp.float32)
            np_in = in_refs[4 * H + h][...].astype(jnp.float32)
            np_tgt = in_refs[5 * H + h][...].astype(jnp.float32)

            # threshold = n_target - p_target ; rank = relu(p_in - n_in + thr)
            rank_elem = jnp.maximum(p_in - n_in + (n_tgt - p_tgt), 0.0)
            sq = ((p_in - p_tgt) ** 2 + (n_in - n_tgt) ** 2
                  + (np_in - np_tgt) ** 2)
            sqrt_mse = jnp.sqrt(sq)

            # Cheap sublane-only reduction per step; the cross-lane (XLU)
            # reduction is deferred to the once-per-chunk finalize block.
            rank_acc[pl.ds(h, 1), :] += jnp.sum(rank_elem, axis=0, keepdims=True)
            mse_acc[pl.ds(h, 1), :] += jnp.sum(sqrt_mse, axis=0, keepdims=True)

        @pl.when(i == pl.num_programs(1) - 1)
        def _finalize():
            rank_sum = jnp.sum(rank_acc[...], axis=1, keepdims=True)   # (H, 1)
            mse_sum = jnp.sum(mse_acc[...], axis=1, keepdims=True)     # (H, 1)
            lane = jax.lax.broadcasted_iota(jnp.int32, (H, _OUT_LANES), 1)
            row = jnp.where(lane == 0, rank_sum,
                  jnp.where(lane == 1, mse_sum, jnp.float32(0.0)))
            out_ref[...] = row[None]     # single lane-dense store per chunk

    return kernel


@functools.lru_cache(maxsize=None)
def _build_call(H, N, D, dtype_name):
    dtype = jnp.dtype(dtype_name)
    itemsize = dtype.itemsize

    tile_n = _pick_tile_n(N, H, D, itemsize)
    num_tiles = N // tile_n
    # 2-way chunking of the reduction so v7x's two TensorCores each stream
    # half of N; free (one extra tiny partial row) on single-core chips.
    n_chunks = 2 if (num_tiles >= 2 and num_tiles % 2 == 0) else 1
    tiles_per_chunk = num_tiles // n_chunks

    in_index_map = lambda c, i: (c * tiles_per_chunk + i, 0)
    in_specs = [pl.BlockSpec((tile_n, D), in_index_map)] * (6 * H)
    out_spec = pl.BlockSpec((1, H, _OUT_LANES), lambda c, i: (c, 0, 0))

    # Per-step footprint: 6*H input tiles (double-buffered) + temporaries.
    step_bytes = 6 * H * tile_n * D * itemsize
    vmem_limit = int(min(32 * 1024 * 1024,
                         max(8 * 1024 * 1024, 2 * step_bytes + (8 << 20))))

    call = pl.pallas_call(
        _make_kernel(H),
        out_shape=jax.ShapeDtypeStruct((n_chunks, H, _OUT_LANES), jnp.float32),
        grid=(n_chunks, tiles_per_chunk),
        in_specs=in_specs,
        out_specs=out_spec,
        scratch_shapes=[pltpu.VMEM((H, D), jnp.float32),
                        pltpu.VMEM((H, D), jnp.float32)],
        compiler_params=pltpu.CompilerParams(
            dimension_semantics=("parallel", "arbitrary"),
            vmem_limit_bytes=vmem_limit),
    )

    @jax.jit
    def run(coefs, *arrays):
        # coefs = [mlp_r, m, 1/(N*D)] as a traced array -> epoch changes never
        # retrace.  Chunk partials are summed here (linearity of the mean).
        partials = call(*arrays)                  # (n_chunks, H, 128)
        sums = jnp.sum(partials, axis=0)          # (H, 128)
        rank = coefs[0] * coefs[2] * sums[:, 0]   # (H,)
        mse = coefs[1] * coefs[2] * sums[:, 1]    # (H,)
        return rank, mse, rank + mse

    return run


class MultiHeadLoss:
    """JAX/Pallas port of the PyTorch MultiHeadLoss module (forward pass)."""

    def __init__(self, epochs):
        self.mlp_r, self.m = (1.0, 1.0)
        step = epochs // 5
        self.Ls = {step * 0: (0, 10), step * 1: (10, 10), step * 2: (10, 1),
                   step * 3: (5, 0.1), step * 4: (1, 0.01)}
        self.init_loss(0)

    def init_loss(self, epoch):
        pass

    def __call__(self, my_config, epoch, p_input_list, p_target_list,
                 n_input_list, n_target_list, np_input_list, np_target_list):
        if epoch in self.Ls:
            self.mlp_r, self.m = self.Ls[epoch]

        H = len(p_input_list)
        groups = (p_input_list, p_target_list, n_input_list, n_target_list,
                  np_input_list, np_target_list)
        arrays = [jnp.asarray(a) for g in groups for a in g]

        shape, dtype = arrays[0].shape, arrays[0].dtype
        assert len(shape) == 2, "expected (N, D) tensors per head"
        for a in arrays:
            assert a.shape == shape and a.dtype == dtype, (
                "all heads/operands must share one (N, D) shape and dtype")
        N, D = shape

        coefs = jnp.array([self.mlp_r, self.m, 1.0 / (N * D)], jnp.float32)
        run = _build_call(H, N, D, jnp.dtype(dtype).name)
        rank, mse, loss = run(coefs, *arrays)      # (H,) device arrays, no sync

        rank_loss_list = [rank[h] for h in range(H)]
        mse_loss_list = [mse[h] for h in range(H)]
        loss_list = [loss[h] for h in range(H)]
        return rank_loss_list, mse_loss_list, loss_list


def _reference(mlp_r, m, p_in, p_tgt, n_in, n_tgt, np_in, np_tgt):
    """Pure-JAX reference matching the PyTorch forward exactly (f32 compute)."""
    p_in, p_tgt, n_in, n_tgt, np_in, np_tgt = (
        x.astype(jnp.float32) for x in (p_in, p_tgt, n_in, n_tgt, np_in, np_tgt))
    threshold = n_tgt - p_tgt
    rank_loss_mlp = jnp.maximum(p_in - n_in + threshold, 0.0)
    mse_loss = (p_in - p_tgt) ** 2 + (n_in - n_tgt) ** 2 + (np_in - np_tgt) ** 2
    rank = jnp.mean(mlp_r * rank_loss_mlp)
    mse = jnp.mean(m * jnp.sqrt(mse_loss))
    loss = jnp.mean(mlp_r * rank_loss_mlp + m * jnp.sqrt(mse_loss))
    return rank, mse, loss


if __name__ == "__main__":
    root = jax.random.PRNGKey(0)

    def make_group_lists(key, H, N, D, dtype):
        keys = jax.random.split(key, 6 * H)
        it = iter(keys)
        groups = []
        for _ in range(6):
            groups.append([jax.random.normal(next(it), (N, D),
                                             jnp.float32).astype(dtype)
                           for _ in range(H)])
        return groups

    epochs = 10
    loss_mod = MultiHeadLoss(epochs)

    cases = [
        # (H, N, D, dtype, epoch)
        (3, 8, 128, jnp.float32, 4),       # tiny single-step fast path
        (2, 4096, 128, jnp.bfloat16, 6),   # tiled 2-chunk parallel reduction
    ]

    for H, N, D, dtype, epoch in cases:
        root, sub = jax.random.split(root)
        p_in, p_tgt, n_in, n_tgt, np_in, np_tgt = make_group_lists(
            sub, H, N, D, dtype)
        rank_l, mse_l, loss_l = loss_mod(None, epoch, p_in, p_tgt,
                                         n_in, n_tgt, np_in, np_tgt)
        jax.block_until_ready((rank_l, mse_l, loss_l))

        mlp_r, m = loss_mod.mlp_r, loss_mod.m
        tol = 1e-5 if dtype == jnp.float32 else 1e-4
        for h in range(H):
            r_ref, m_ref, l_ref = _reference(mlp_r, m, p_in[h], p_tgt[h],
                                             n_in[h], n_tgt[h],
                                             np_in[h], np_tgt[h])
            assert jnp.allclose(rank_l[h], r_ref, rtol=tol, atol=tol), (h, "rank")
            assert jnp.allclose(mse_l[h], m_ref, rtol=tol, atol=tol), (h, "mse")
            assert jnp.allclose(loss_l[h], l_ref, rtol=tol, atol=tol), (h, "loss")

    print("KERNEL_OK")
</pallas_src>

<mosaic_0001>
module attributes {stable_mosaic.version = 11 : i64} {
  func.func @kernel(%arg0: i32, %arg1: i32, %arg2: memref<8x128xf32, #tpu.memory_space<vmem>>, %arg3: memref<8x128xf32, #tpu.memory_space<vmem>>, %arg4: memref<8x128xf32, #tpu.memory_space<vmem>>, %arg5: memref<8x128xf32, #tpu.memory_space<vmem>>, %arg6: memref<8x128xf32, #tpu.memory_space<vmem>>, %arg7: memref<8x128xf32, #tpu.memory_space<vmem>>, %arg8: memref<8x128xf32, #tpu.memory_space<vmem>>, %arg9: memref<8x128xf32, #tpu.memory_space<vmem>>, %arg10: memref<8x128xf32, #tpu.memory_space<vmem>>, %arg11: memref<8x128xf32, #tpu.memory_space<vmem>>, %arg12: memref<8x128xf32, #tpu.memory_space<vmem>>, %arg13: memref<8x128xf32, #tpu.memory_space<vmem>>, %arg14: memref<8x128xf32, #tpu.memory_space<vmem>>, %arg15: memref<8x128xf32, #tpu.memory_space<vmem>>, %arg16: memref<8x128xf32, #tpu.memory_space<vmem>>, %arg17: memref<8x128xf32, #tpu.memory_space<vmem>>, %arg18: memref<8x128xf32, #tpu.memory_space<vmem>>, %arg19: memref<8x128xf32, #tpu.memory_space<vmem>>, %arg20: memref<1x3x128xf32, #tpu.memory_space<vmem>>, %arg21: memref<3x128xf32, #tpu.memory_space<vmem>>, %arg22: memref<3x128xf32, #tpu.memory_space<vmem>>) attributes {dimension_semantics = [#tpu.dimension_semantics<parallel>, #tpu.dimension_semantics<arbitrary>], iteration_bounds = array<i64: 1, 1>, scalar_prefetch = 0 : i64, scratch_operands = 2 : i64, tpu.core_type = #tpu.core_type<tc>, window_params = [{transform_indices = @transform_0, window_bounds = array<i64: 8, 128>}, {transform_indices = @transform_1, window_bounds = array<i64: 8, 128>}, {transform_indices = @transform_2, window_bounds = array<i64: 8, 128>}, {transform_indices = @transform_3, window_bounds = array<i64: 8, 128>}, {transform_indices = @transform_4, window_bounds = array<i64: 8, 128>}, {transform_indices = @transform_5, window_bounds = array<i64: 8, 128>}, {transform_indices = @transform_6, window_bounds = array<i64: 8, 128>}, {transform_indices = @transform_7, window_bounds = array<i64: 8, 128>}, {transform_indices = @transform_8, window_bounds = array<i64: 8, 128>}, {transform_indices = @transform_9, window_bounds = array<i64: 8, 128>}, {transform_indices = @transform_10, window_bounds = array<i64: 8, 128>}, {transform_indices = @transform_11, window_bounds = array<i64: 8, 128>}, {transform_indices = @transform_12, window_bounds = array<i64: 8, 128>}, {transform_indices = @transform_13, window_bounds = array<i64: 8, 128>}, {transform_indices = @transform_14, window_bounds = array<i64: 8, 128>}, {transform_indices = @transform_15, window_bounds = array<i64: 8, 128>}, {transform_indices = @transform_16, window_bounds = array<i64: 8, 128>}, {transform_indices = @transform_17, window_bounds = array<i64: 8, 128>}, {transform_indices = @transform_18, window_bounds = array<i64: 1, 3, 128>}]} {
    %c0_i32 = arith.constant 0 : i32
    %0 = arith.cmpi eq, %arg1, %c0_i32 : i32
    %1 = arith.extui %0 : i1 to i32
    %c0_i32_0 = arith.constant 0 : i32
    %2 = arith.cmpi ne, %1, %c0_i32_0 : i32
    scf.if %2 {
      %cst_68 = arith.constant 0.000000e+00 : f32
      %96 = vector.broadcast %cst_68 : f32 to vector<3x128xf32>
      %c0_69 = arith.constant 0 : index
      %c0_70 = arith.constant 0 : index
      %97 = vector.load %arg21[%c0_69, %c0_70] : memref<3x128xf32, #tpu.memory_space<vmem>>, vector<3x128xf32>
      tpu.vector_store %arg21[%c0_69, %c0_70], %96 {strides = array<i32>} : memref<3x128xf32, #tpu.memory_space<vmem>>, vector<3x128xf32>,
      %cst_71 = arith.constant 0.000000e+00 : f32
      %98 = vector.broadcast %cst_71 : f32 to vector<3x128xf32>
      %c0_72 = arith.constant 0 : index
      %c0_73 = arith.constant 0 : index
      %99 = vector.load %arg22[%c0_72, %c0_73] : memref<3x128xf32, #tpu.memory_space<vmem>>, vector<3x128xf32>
      tpu.vector_store %arg22[%c0_72, %c0_73], %98 {strides = array<i32>} : memref<3x128xf32, #tpu.memory_space<vmem>>, vector<3x128xf32>,
    } else {
    }
    %c0 = arith.constant 0 : index
    %c0_1 = arith.constant 0 : index
    %3 = vector.load %arg2[%c0, %c0_1] : memref<8x128xf32, #tpu.memory_space<vmem>>, vector<8x128xf32>
    %c0_2 = arith.constant 0 : index
    %c0_3 = arith.constant 0 : index
    %4 = vector.load %arg5[%c0_2, %c0_3] : memref<8x128xf32, #tpu.memory_space<vmem>>, vector<8x128xf32>
    %c0_4 = arith.constant 0 : index
    %c0_5 = arith.constant 0 : index
    %5 = vector.load %arg8[%c0_4, %c0_5] : memref<8x128xf32, #tpu.memory_space<vmem>>, vector<8x128xf32>
    %c0_6 = arith.constant 0 : index
    %c0_7 = arith.constant 0 : index
    %6 = vector.load %arg11[%c0_6, %c0_7] : memref<8x128xf32, #tpu.memory_space<vmem>>, vector<8x128xf32>
    %c0_8 = arith.constant 0 : index
    %c0_9 = arith.constant 0 : index
    %7 = vector.load %arg14[%c0_8, %c0_9] : memref<8x128xf32, #tpu.memory_space<vmem>>, vector<8x128xf32>
    %c0_10 = arith.constant 0 : index
    %c0_11 = arith.constant 0 : index
    %8 = vector.load %arg17[%c0_10, %c0_11] : memref<8x128xf32, #tpu.memory_space<vmem>>, vector<8x128xf32>
    %9 = arith.subf %3, %5 : vector<8x128xf32>
    %10 = arith.subf %6, %4 : vector<8x128xf32>
    %11 = arith.addf %9, %10 : vector<8x128xf32>
    %cst = arith.constant 0.000000e+00 : f32
    %12 = vector.broadcast %cst : f32 to vector<8x128xf32>
    %13 = arith.maximumf %11, %12 : vector<8x128xf32>
    %14 = arith.subf %3, %4 : vector<8x128xf32>
    %15 = arith.mulf %14, %14 : vector<8x128xf32>
    %16 = arith.subf %5, %6 : vector<8x128xf32>
    %17 = arith.mulf %16, %16 : vector<8x128xf32>
    %18 = arith.addf %15, %17 : vector<8x128xf32>
    %19 = arith.subf %7, %8 : vector<8x128xf32>
    %20 = arith.mulf %19, %19 : vector<8x128xf32>
    %21 = arith.addf %18, %20 : vector<8x128xf32>
    %22 = math.sqrt %21 : vector<8x128xf32>
    %c0_12 = arith.constant 0 : index
    %c0_13 = arith.constant 0 : index
    %23 = vector.load %arg21[%c0_12, %c0_13] : memref<3x128xf32, #tpu.memory_space<vmem>>, vector<1x128xf32>
    %cst_14 = arith.constant dense<0.000000e+00> : vector<128xf32>
    %24 = vector.multi_reduction <add>, %13, %cst_14 [0] : vector<8x128xf32> to vector<128xf32>
    %25 = vector.shape_cast %24 : vector<128xf32> to vector<1x128xf32>
    %26 = arith.addf %23, %25 : vector<1x128xf32>
    %c0_15 = arith.constant 0 : index
    %c0_16 = arith.constant 0 : index
    %27 = vector.load %arg21[%c0_15, %c0_16] : memref<3x128xf32, #tpu.memory_space<vmem>>, vector<1x128xf32>
    tpu.vector_store %arg21[%c0_15, %c0_16], %26 {strides = array<i32>} : memref<3x128xf32, #tpu.memory_space<vmem>>, vector<1x128xf32>,
    %c0_17 = arith.constant 0 : index
    %c0_18 = arith.constant 0 : index
    %28 = vector.load %arg22[%c0_17, %c0_18] : memref<3x128xf32, #tpu.memory_space<vmem>>, vector<1x128xf32>
    %cst_19 = arith.constant dense<0.000000e+00> : vector<128xf32>
    %29 = vector.multi_reduction <add>, %22, %cst_19 [0] : vector<8x128xf32> to vector<128xf32>
    %30 = vector.shape_cast %29 : vector<128xf32> to vector<1x128xf32>
    %31 = arith.addf %28, %30 : vector<1x128xf32>
    %c0_20 = arith.constant 0 : index
    %c0_21 = arith.constant 0 : index
    %32 = vector.load %arg22[%c0_20, %c0_21] : memref<3x128xf32, #tpu.memory_space<vmem>>, vector<1x128xf32>
    tpu.vector_store %arg22[%c0_20, %c0_21], %31 {strides = array<i32>} : memref<3x128xf32, #tpu.memory_space<vmem>>, vector<1x128xf32>,
    %c0_22 = arith.constant 0 : index
    %c0_23 = arith.constant 0 : index
    %33 = vector.load %arg3[%c0_22, %c0_23] : memref<8x128xf32, #tpu.memory_space<vmem>>, vector<8x128xf32>
    %c0_24 = arith.constant 0 : index
    %c0_25 = arith.constant 0 : index
    %34 = vector.load %arg6[%c0_24, %c0_25] : memref<8x128xf32, #tpu.memory_space<vmem>>, vector<8x128xf32>
    %c0_26 = arith.constant 0 : index
    %c0_27 = arith.constant 0 : index
    %35 = vector.load %arg9[%c0_26, %c0_27] : memref<8x128xf32, #tpu.memory_space<vmem>>, vector<8x128xf32>
    %c0_28 = arith.constant 0 : index
    %c0_29 = arith.constant 0 : index
    %36 = vector.load %arg12[%c0_28, %c0_29] : memref<8x128xf32, #tpu.memory_space<vmem>>, vector<8x128xf32>
    %c0_30 = arith.constant 0 : index
    %c0_31 = arith.constant 0 : index
    %37 = vector.load %arg15[%c0_30, %c0_31] : memref<8x128xf32, #tpu.memory_space<vmem>>, vector<8x128xf32>
    %c0_32 = arith.constant 0 : index
    %c0_33 = arith.constant 0 : index
    %38 = vector.load %arg18[%c0_32, %c0_33] : memref<8x128xf32, #tpu.memory_space<vmem>>, vector<8x128xf32>
    %39 = arith.subf %33, %35 : vector<8x128xf32>
    %40 = arith.subf %36, %34 : vector<8x128xf32>
    %41 = arith.addf %39, %40 : vector<8x128xf32>
    %cst_34 = arith.constant 0.000000e+00 : f32
    %42 = vector.broadcast %cst_34 : f32 to vector<8x128xf32>
    %43 = arith.maximumf %41, %42 : vector<8x128xf32>
    %44 = arith.subf %33, %34 : vector<8x128xf32>
    %45 = arith.mulf %44, %44 : vector<8x128xf32>
    %46 = arith.subf %35, %36 : vector<8x128xf32>
    %47 = arith.mulf %46, %46 : vector<8x128xf32>
    %48 = arith.addf %45, %47 : vector<8x128xf32>
    %49 = arith.subf %37, %38 : vector<8x128xf32>
    %50 = arith.mulf %49, %49 : vector<8x128xf32>
    %51 = arith.addf %48, %50 : vector<8x128xf32>
    %52 = math.sqrt %51 : vector<8x128xf32>
    %c1 = arith.constant 1 : index
    %c0_35 = arith.constant 0 : index
    %53 = vector.load %arg21[%c1, %c0_35] : memref<3x128xf32, #tpu.memory_space<vmem>>, vector<1x128xf32>
    %cst_36 = arith.constant dense<0.000000e+00> : vector<128xf32>
    %54 = vector.multi_reduction <add>, %43, %cst_36 [0] : vector<8x128xf32> to vector<128xf32>
    %55 = vector.shape_cast %54 : vector<128xf32> to vector<1x128xf32>
    %56 = arith.addf %53, %55 : vector<1x128xf32>
    %c1_37 = arith.constant 1 : index
    %c0_38 = arith.constant 0 : index
    %57 = vector.load %arg21[%c1_37, %c0_38] : memref<3x128xf32, #tpu.memory_space<vmem>>, vector<1x128xf32>
    tpu.vector_store %arg21[%c1_37, %c0_38], %56 {strides = array<i32>} : memref<3x128xf32, #tpu.memory_space<vmem>>, vector<1x128xf32>,
    %c1_39 = arith.constant 1 : index
    %c0_40 = arith.constant 0 : index
    %58 = vector.load %arg22[%c1_39, %c0_40] : memref<3x128xf32, #tpu.memory_space<vmem>>, vector<1x128xf32>
    %cst_41 = arith.constant dense<0.000000e+00> : vector<128xf32>
    %59 = vector.multi_reduction <add>, %52, %cst_41 [0] : vector<8x128xf32> to vector<128xf32>
    %60 = vector.shape_cast %59 : vector<128xf32> to vector<1x128xf32>
    %61 = arith.addf %58, %60 : vector<1x128xf32>
    %c1_42 = arith.constant 1 : index
    %c0_43 = arith.constant 0 : index
    %62 = vector.load %arg22[%c1_42, %c0_43] : memref<3x128xf32, #tpu.memory_space<vmem>>, vector<1x128xf32>
    tpu.vector_store %arg22[%c1_42, %c0_43], %61 {strides = array<i32>} : memref<3x128xf32, #tpu.memory_space<vmem>>, vector<1x128xf32>,
    %c0_44 = arith.constant 0 : index
    %c0_45 = arith.constant 0 : index
    %63 = vector.load %arg4[%c0_44, %c0_45] : memref<8x128xf32, #tpu.memory_space<vmem>>, vector<8x128xf32>
    %c0_46 = arith.constant 0 : index
    %c0_47 = arith.constant 0 : index
    %64 = vector.load %arg7[%c0_46, %c0_47] : memref<8x128xf32, #tpu.memory_space<vmem>>, vector<8x128xf32>
    %c0_48 = arith.constant 0 : index
    %c0_49 = arith.constant 0 : index
    %65 = vector.load %arg10[%c0_48, %c0_49] : memref<8x128xf32, #tpu.memory_space<vmem>>, vector<8x128xf32>
    %c0_50 = arith.constant 0 : index
    %c0_51 = arith.constant 0 : index
    %66 = vector.load %arg13[%c0_50, %c0_51] : memref<8x128xf32, #tpu.memory_space<vmem>>, vector<8x128xf32>
    %c0_52 = arith.constant 0 : index
    %c0_53 = arith.constant 0 : index
    %67 = vector.load %arg16[%c0_52, %c0_53] : memref<8x128xf32, #tpu.memory_space<vmem>>, vector<8x128xf32>
    %c0_54 = arith.constant 0 : index
    %c0_55 = arith.constant 0 : index
    %68 = vector.load %arg19[%c0_54, %c0_55] : memref<8x128xf32, #tpu.memory_space<vmem>>, vector<8x128xf32>
    %69 = arith.subf %63, %65 : vector<8x128xf32>
    %70 = arith.subf %66, %64 : vector<8x128xf32>
    %71 = arith.addf %69, %70 : vector<8x128xf32>
    %cst_56 = arith.constant 0.000000e+00 : f32
    %72 = vector.broadcast %cst_56 : f32 to vector<8x128xf32>
    %73 = arith.maximumf %71, %72 : vector<8x128xf32>
    %74 = arith.subf %63, %64 : vector<8x128xf32>
    %75 = arith.mulf %74, %74 : vector<8x128xf32>
    %76 = arith.subf %65, %66 : vector<8x128xf32>
    %77 = arith.mulf %76, %76 : vector<8x128xf32>
    %78 = arith.addf %75, %77 : vector<8x128xf32>
    %79 = arith.subf %67, %68 : vector<8x128xf32>
    %80 = arith.mulf %79, %79 : vector<8x128xf32>
    %81 = arith.addf %78, %80 : vector<8x128xf32>
    %82 = math.sqrt %81 : vector<8x128xf32>
    %c2 = arith.constant 2 : index
    %c0_57 = arith.constant 0 : index
    %83 = vector.load %arg21[%c2, %c0_57] : memref<3x128xf32, #tpu.memory_space<vmem>>, vector<1x128xf32>
    %cst_58 = arith.constant dense<0.000000e+00> : vector<128xf32>
    %84 = vector.multi_reduction <add>, %73, %cst_58 [0] : vector<8x128xf32> to vector<128xf32>
    %85 = vector.shape_cast %84 : vector<128xf32> to vector<1x128xf32>
    %86 = arith.addf %83, %85 : vector<1x128xf32>
    %c2_59 = arith.constant 2 : index
    %c0_60 = arith.constant 0 : index
    %87 = vector.load %arg21[%c2_59, %c0_60] : memref<3x128xf32, #tpu.memory_space<vmem>>, vector<1x128xf32>
    tpu.vector_store %arg21[%c2_59, %c0_60], %86 {strides = array<i32>} : memref<3x128xf32, #tpu.memory_space<vmem>>, vector<1x128xf32>,
    %c2_61 = arith.constant 2 : index
    %c0_62 = arith.constant 0 : index
    %88 = vector.load %arg22[%c2_61, %c0_62] : memref<3x128xf32, #tpu.memory_space<vmem>>, vector<1x128xf32>
    %cst_63 = arith.constant dense<0.000000e+00> : vector<128xf32>
    %89 = vector.multi_reduction <add>, %82, %cst_63 [0] : vector<8x128xf32> to vector<128xf32>
    %90 = vector.shape_cast %89 : vector<128xf32> to vector<1x128xf32>
    %91 = arith.addf %88, %90 : vector<1x128xf32>
    %c2_64 = arith.constant 2 : index
    %c0_65 = arith.constant 0 : index
    %92 = vector.load %arg22[%c2_64, %c0_65] : memref<3x128xf32, #tpu.memory_space<vmem>>, vector<1x128xf32>
    tpu.vector_store %arg22[%c2_64, %c0_65], %91 {strides = array<i32>} : memref<3x128xf32, #tpu.memory_space<vmem>>, vector<1x128xf32>,
    %c0_i32_66 = arith.constant 0 : i32
    %93 = arith.cmpi eq, %arg1, %c0_i32_66 : i32
    %94 = arith.extui %93 : i1 to i32
    %c0_i32_67 = arith.constant 0 : i32
    %95 = arith.cmpi ne, %94, %c0_i32_67 : i32
    scf.if %95 {
      %c0_68 = arith.constant 0 : index
      %c0_69 = arith.constant 0 : index
      %96 = vector.load %arg21[%c0_68, %c0_69] : memref<3x128xf32, #tpu.memory_space<vmem>>, vector<3x128xf32>
      %cst_70 = arith.constant dense<0.000000e+00> : vector<3xf32>
      %97 = vector.multi_reduction <add>, %96, %cst_70 [1] : vector<3x128xf32> to vector<3xf32>
      %98 = vector.shape_cast %97 : vector<3xf32> to vector<3x1xf32>
      %c0_71 = arith.constant 0 : index
      %c0_72 = arith.constant 0 : index
      %99 = vector.load %arg22[%c0_71, %c0_72] : memref<3x128xf32, #tpu.memory_space<vmem>>, vector<3x128xf32>
      %cst_73 = arith.constant dense<0.000000e+00> : vector<3xf32>
      %100 = vector.multi_reduction <add>, %99, %cst_73 [1] : vector<3x128xf32> to vector<3xf32>
      %101 = vector.shape_cast %100 : vector<3xf32> to vector<3x1xf32>
      %102 = tpu.iota {dimensions = array<i32: 1>} : vector<3x128xi32>
      %c0_i32_74 = arith.constant 0 : i32
      %103 = vector.broadcast %c0_i32_74 : i32 to vector<3x128xi32>
      %104 = arith.cmpi eq, %102, %103 : vector<3x128xi32>
      %c1_i32 = arith.constant 1 : i32
      %105 = vector.broadcast %c1_i32 : i32 to vector<3x128xi32>
      %106 = arith.cmpi eq, %102, %105 : vector<3x128xi32>
      %cst_75 = arith.constant 0.000000e+00 : f32
      %107 = vector.shape_cast %101 : vector<3x1xf32> to vector<3x1xf32>
      %108 = vector.broadcast %107 : vector<3x1xf32> to vector<3x128xf32>
      %109 = vector.broadcast %cst_75 : f32 to vector<3x128xf32>
      %110 = arith.select %106, %108, %109 : vector<3x128xi1>, vector<3x128xf32>
      %111 = vector.shape_cast %98 : vector<3x1xf32> to vector<3x1xf32>
      %112 = vector.broadcast %111 : vector<3x1xf32> to vector<3x128xf32>
      %113 = arith.select %104, %112, %110 : vector<3x128xi1>, vector<3x128xf32>
      %114 = vector.shape_cast %113 : vector<3x128xf32> to vector<1x3x128xf32>
      %c0_76 = arith.constant 0 : index
      %c0_77 = arith.constant 0 : index
      %c0_78 = arith.constant 0 : index
      %115 = vector.load %arg20[%c0_76, %c0_77, %c0_78] : memref<1x3x128xf32, #tpu.memory_space<vmem>>, vector<1x3x128xf32>
      tpu.vector_store %arg20[%c0_76, %c0_77, %c0_78], %114 {strides = array<i32>} : memref<1x3x128xf32, #tpu.memory_space<vmem>>, vector<1x3x128xf32>,
    } else {
    }
    return
  }
  func.func @transform_0(%arg0: i32, %arg1: i32) -> (i32, i32) {
    %c1_i32 = arith.constant 1 : i32
    %0 = arith.muli %arg0, %c1_i32 : i32
    %1 = arith.addi %0, %arg1 : i32
    %c0_i32 = arith.constant 0 : i32
    %c0_i32_0 = arith.constant 0 : i32
    return %1, %c0_i32 : i32, i32
  }
  func.func @transform_1(%arg0: i32, %arg1: i32) -> (i32, i32) {
    %c1_i32 = arith.constant 1 : i32
    %0 = arith.muli %arg0, %c1_i32 : i32
    %1 = arith.addi %0, %arg1 : i32
    %c0_i32 = arith.constant 0 : i32
    %c0_i32_0 = arith.constant 0 : i32
    return %1, %c0_i32 : i32, i32
  }
  func.func @transform_2(%arg0: i32, %arg1: i32) -> (i32, i32) {
    %c1_i32 = arith.constant 1 : i32
    %0 = arith.muli %arg0, %c1_i32 : i32
    %1 = arith.addi %0, %arg1 : i32
    %c0_i32 = arith.constant 0 : i32
    %c0_i32_0 = arith.constant 0 : i32
    return %1, %c0_i32 : i32, i32
  }
  func.func @transform_3(%arg0: i32, %arg1: i32) -> (i32, i32) {
    %c1_i32 = arith.constant 1 : i32
    %0 = arith.muli %arg0, %c1_i32 : i32
    %1 = arith.addi %0, %arg1 : i32
    %c0_i32 = arith.constant 0 : i32
    %c0_i32_0 = arith.constant 0 : i32
    return %1, %c0_i32 : i32, i32
  }
  func.func @transform_4(%arg0: i32, %arg1: i32) -> (i32, i32) {
    %c1_i32 = arith.constant 1 : i32
    %0 = arith.muli %arg0, %c1_i32 : i32
    %1 = arith.addi %0, %arg1 : i32
    %c0_i32 = arith.constant 0 : i32
    %c0_i32_0 = arith.constant 0 : i32
    return %1, %c0_i32 : i32, i32
  }
  func.func @transform_5(%arg0: i32, %arg1: i32) -> (i32, i32) {
    %c1_i32 = arith.constant 1 : i32
    %0 = arith.muli %arg0, %c1_i32 : i32
    %1 = arith.addi %0, %arg1 : i32
    %c0_i32 = arith.constant 0 : i32
    %c0_i32_0 = arith.constant 0 : i32
    return %1, %c0_i32 : i32, i32
  }
  func.func @transform_6(%arg0: i32, %arg1: i32) -> (i32, i32) {
    %c1_i32 = arith.constant 1 : i32
    %0 = arith.muli %arg0, %c1_i32 : i32
    %1 = arith.addi %0, %arg1 : i32
    %c0_i32 = arith.constant 0 : i32
    %c0_i32_0 = arith.constant 0 : i32
    return %1, %c0_i32 : i32, i32
  }
  func.func @transform_7(%arg0: i32, %arg1: i32) -> (i32, i32) {
    %c1_i32 = arith.constant 1 : i32
    %0 = arith.muli %arg0, %c1_i32 : i32
    %1 = arith.addi %0, %arg1 : i32
    %c0_i32 = arith.constant 0 : i32
    %c0_i32_0 = arith.constant 0 : i32
    return %1, %c0_i32 : i32, i32
  }
  func.func @transform_8(%arg0: i32, %arg1: i32) -> (i32, i32) {
    %c1_i32 = arith.constant 1 : i32
    %0 = arith.muli %arg0, %c1_i32 : i32
    %1 = arith.addi %0, %arg1 : i32
    %c0_i32 = arith.constant 0 : i32
    %c0_i32_0 = arith.constant 0 : i32
    return %1, %c0_i32 : i32, i32
  }
  func.func @transform_9(%arg0: i32, %arg1: i32) -> (i32, i32) {
    %c1_i32 = arith.constant 1 : i32
    %0 = arith.muli %arg0, %c1_i32 : i32
    %1 = arith.addi %0, %arg1 : i32
    %c0_i32 = arith.constant 0 : i32
    %c0_i32_0 = arith.constant 0 : i32
    return %1, %c0_i32 : i32, i32
  }
  func.func @transform_10(%arg0: i32, %arg1: i32) -> (i32, i32) {
    %c1_i32 = arith.constant 1 : i32
    %0 = arith.muli %arg0, %c1_i32 : i32
    %1 = arith.addi %0, %arg1 : i32
    %c0_i32 = arith.constant 0 : i32
    %c0_i32_0 = arith.constant 0 : i32
    return %1, %c0_i32 : i32, i32
  }
  func.func @transform_11(%arg0: i32, %arg1: i32) -> (i32, i32) {
    %c1_i32 = arith.constant 1 : i32
    %0 = arith.muli %arg0, %c1_i32 : i32
    %1 = arith.addi %0, %arg1 : i32
    %c0_i32 = arith.constant 0 : i32
    %c0_i32_0 = arith.constant 0 : i32
    return %1, %c0_i32 : i32, i32
  }
  func.func @transform_12(%arg0: i32, %arg1: i32) -> (i32, i32) {
    %c1_i32 = arith.constant 1 : i32
    %0 = arith.muli %arg0, %c1_i32 : i32
    %1 = arith.addi %0, %arg1 : i32
    %c0_i32 = arith.constant 0 : i32
    %c0_i32_0 = arith.constant 0 : i32
    return %1, %c0_i32 : i32, i32
  }
  func.func @transform_13(%arg0: i32, %arg1: i32) -> (i32, i32) {
    %c1_i32 = arith.constant 1 : i32
    %0 = arith.muli %arg0, %c1_i32 : i32
    %1 = arith.addi %0, %arg1 : i32
    %c0_i32 = arith.constant 0 : i32
    %c0_i32_0 = arith.constant 0 : i32
    return %1, %c0_i32 : i32, i32
  }
  func.func @transform_14(%arg0: i32, %arg1: i32) -> (i32, i32) {
    %c1_i32 = arith.constant 1 : i32
    %0 = arith.muli %arg0, %c1_i32 : i32
    %1 = arith.addi %0, %arg1 : i32
    %c0_i32 = arith.constant 0 : i32
    %c0_i32_0 = arith.constant 0 : i32
    return %1, %c0_i32 : i32, i32
  }
  func.func @transform_15(%arg0: i32, %arg1: i32) -> (i32, i32) {
    %c1_i32 = arith.constant 1 : i32
    %0 = arith.muli %arg0, %c1_i32 : i32
    %1 = arith.addi %0, %arg1 : i32
    %c0_i32 = arith.constant 0 : i32
    %c0_i32_0 = arith.constant 0 : i32
    return %1, %c0_i32 : i32, i32
  }
  func.func @transform_16(%arg0: i32, %arg1: i32) -> (i32, i32) {
    %c1_i32 = arith.constant 1 : i32
    %0 = arith.muli %arg0, %c1_i32 : i32
    %1 = arith.addi %0, %arg1 : i32
    %c0_i32 = arith.constant 0 : i32
    %c0_i32_0 = arith.constant 0 : i32
    return %1, %c0_i32 : i32, i32
  }
  func.func @transform_17(%arg0: i32, %arg1: i32) -> (i32, i32) {
    %c1_i32 = arith.constant 1 : i32
    %0 = arith.muli %arg0, %c1_i32 : i32
    %1 = arith.addi %0, %arg1 : i32
    %c0_i32 = arith.constant 0 : i32
    %c0_i32_0 = arith.constant 0 : i32
    return %1, %c0_i32 : i32, i32
  }
  func.func @transform_18(%arg0: i32, %arg1: i32) -> (i32, i32, i32) {
    %c0_i32 = arith.constant 0 : i32
    %c0_i32_0 = arith.constant 0 : i32
    %c0_i32_1 = arith.constant 0 : i32
    return %arg0, %c0_i32, %c0_i32_0 : i32, i32, i32
  }
}

</mosaic_0001>

<llo_original>
// kernel: run.1
$region0: #{run.1}
  #allocation0 [shape = 'u32[]', space=smem, size = 0x4, offset = 0x4, fixed_abs, tag = 'smem constant byte address 0x4 - core index']
  #allocation1 [shape = 'u32[144,128]{1,0:T(1,128)}', space=vmem, size = 0x12000, scoped, tag = 'internal scratch']
  #allocation2 [shape = 'f32[3,128]{1,0:T(4,128)}', space=vmem, size = 0x800, scoped, tag = 'scratch operand']
  #allocation3 [shape = 'f32[3,128]{1,0:T(4,128)}', space=vmem, size = 0x800, scoped, tag = 'scratch operand']
  %s0 = inlined_call_operand.vmem [shape: f32[8,128], index: 0, kind: input, shape index: {}]
  %s1 = inlined_call_operand.vmem [shape: f32[8,128], index: 1, kind: input, shape index: {}]
  %s2 = inlined_call_operand.vmem [shape: f32[8,128], index: 2, kind: input, shape index: {}]
  %s3 = inlined_call_operand.vmem [shape: f32[8,128], index: 3, kind: input, shape index: {}]
  %s4 = inlined_call_operand.vmem [shape: f32[8,128], index: 4, kind: input, shape index: {}]
  %s5 = inlined_call_operand.vmem [shape: f32[8,128], index: 5, kind: input, shape index: {}]
  %s6 = inlined_call_operand.vmem [shape: f32[8,128], index: 6, kind: input, shape index: {}]
  %s7 = inlined_call_operand.hbm [shape: f32[8,128], index: 7, kind: input, shape index: {}]
  %s8 = inlined_call_operand.vmem [shape: f32[8,128], index: 8, kind: input, shape index: {}]
  %s9 = inlined_call_operand.hbm [shape: f32[8,128], index: 9, kind: input, shape index: {}]
  %s10 = inlined_call_operand.vmem [shape: f32[8,128], index: 10, kind: input, shape index: {}]
  %s11 = inlined_call_operand.hbm [shape: f32[8,128], index: 11, kind: input, shape index: {}]
  %s12 = inlined_call_operand.vmem [shape: f32[8,128], index: 12, kind: input, shape index: {}]
  %s13 = inlined_call_operand.hbm [shape: f32[8,128], index: 13, kind: input, shape index: {}]
  %s14 = inlined_call_operand.vmem [shape: f32[8,128], index: 14, kind: input, shape index: {}]
  %s15 = inlined_call_operand.hbm [shape: f32[8,128], index: 15, kind: input, shape index: {}]
  %s16 = inlined_call_operand.vmem [shape: f32[8,128], index: 16, kind: input, shape index: {}]
  %s17 = inlined_call_operand.hbm [shape: f32[8,128], index: 17, kind: input, shape index: {}]
  %s18 = inlined_call_operand.vmem [shape: f32[1,3,128], index: 18, kind: output, shape index: {}]
  %s19 = sld [smem:[#allocation0]]
  $region114: #{run.1} parent=0
    _
  %s21 = ssub.s32 1, %s19
  %s22 = scalar_select 0, %s21, %s19
  $region1: #{run.1} parent=0
    #allocation4 [shape = 'u8[4096]{0}', space=vmem, size = 0x1000, scoped, tag = 'input window, operand 7, single buffered']
    #allocation5 [shape = 's32[1]{0}', space=sflag, size = 0x4, scoped, tag = 'scoped memory for run.1']
    #allocation6 [shape = 'u8[4096]{0}', space=vmem, size = 0x1000, scoped, tag = 'input window, operand 9, single buffered']
    #allocation7 [shape = 's32[1]{0}', space=sflag, size = 0x4, scoped, tag = 'scoped memory for run.1']
    #allocation8 [shape = 'u8[4096]{0}', space=vmem, size = 0x1000, scoped, tag = 'input window, operand 11, single buffered']
    #allocation9 [shape = 'u8[4096]{0}', space=vmem, size = 0x1000, scoped, tag = 'input window, operand 13, single buffered']
    #allocation10 [shape = 's32[1]{0}', space=sflag, size = 0x4, scoped, tag = 'scoped memory for run.1']
    #allocation11 [shape = 'u8[4096]{0}', space=vmem, size = 0x1000, scoped, tag = 'input window, operand 15, single buffered']
    #allocation12 [shape = 'u8[4096]{0}', space=vmem, size = 0x1000, scoped, tag = 'input window, operand 17, single buffered']
    #allocation13 [shape = 's32[1]{0}', space=sflag, size = 0x4, scoped, tag = 'scoped memory for run.1']
    %23 = vsyncpa [#allocation5], 0
    %24 = vsyncpa [#allocation7], 0
    %25 = vsyncpa [#allocation10], 0
    %26 = vsyncpa [#allocation13], 0
    // Predicated region
    $region2: #{run.1} parent=1 // pred_check
      _
    $region3: #{run.1} parent=1 // pred_check_branch
      %28 = sbr.rel (0) target = $region5
    $region4: #{run.1} parent=1 // pred_region
      %s29 = sadd.s32 0, 0
      %p30 = scmp.lt.s32.totalorder %s29, 0
      %s31 = scalar_select %p30, %s29, 0
      %s32 = smul.addr %s31, 8
      %s33 = scalar_lea.vmem %s0, %s32
      %s34 = sadd.s32 0, 0
    $region5: #{run.1} parent=1 // pred_fallthru
      _
    // Predicated region
    $region6: #{run.1} parent=1 // pred_check
      _
    $region7: #{run.1} parent=1 // pred_check_branch
      %36 = sbr.rel (0) target = $region9
    $region8: #{run.1} parent=1 // pred_region
      %s37 = sadd.s32 0, 0
      %p38 = scmp.lt.s32.totalorder %s37, 0
      %s39 = scalar_select %p38, %s37, 0
      %s40 = smul.addr %s39, 8
      %s41 = scalar_lea.vmem %s1, %s40
      %s42 = sadd.s32 0, 0
    $region9: #{run.1} parent=1 // pred_fallthru
      _
    // Predicated region
    $region10: #{run.1} parent=1 // pred_check
      _
    $region11: #{run.1} parent=1 // pred_check_branch
      %44 = sbr.rel (0) target = $region13
    $region12: #{run.1} parent=1 // pred_region
      %s45 = sadd.s32 0, 0
      %p46 = scmp.lt.s32.totalorder %s45, 0
      %s47 = scalar_select %p46, %s45, 0
      %s48 = smul.addr %s47, 8
      %s49 = scalar_lea.vmem %s2, %s48
      %s50 = sadd.s32 0, 0
    $region13: #{run.1} parent=1 // pred_fallthru
      _
    // Predicated region
    $region14: #{run.1} parent=1 // pred_check
      _
    $region15: #{run.1} parent=1 // pred_check_branch
      %52 = sbr.rel (0) target = $region17
    $region16: #{run.1} parent=1 // pred_region
      %s53 = sadd.s32 0, 0
      %p54 = scmp.lt.s32.totalorder %s53, 0
      %s55 = scalar_select %p54, %s53, 0
      %s56 = smul.addr %s55, 8
      %s57 = scalar_lea.vmem %s3, %s56
      %s58 = sadd.s32 0, 0
    $region17: #{run.1} parent=1 // pred_fallthru
      _
    // Predicated region
    $region18: #{run.1} parent=1 // pred_check
      _
    $region19: #{run.1} parent=1 // pred_check_branch
      %60 = sbr.rel (0) target = $region21
    $region20: #{run.1} parent=1 // pred_region
      %s61 = sadd.s32 0, 0
      %p62 = scmp.lt.s32.totalorder %s61, 0
      %s63 = scalar_select %p62, %s61, 0
      %s64 = smul.addr %s63, 8
      %s65 = scalar_lea.vmem %s4, %s64
      %s66 = sadd.s32 0, 0
    $region21: #{run.1} parent=1 // pred_fallthru
      _
    // Predicated region
    $region22: #{run.1} parent=1 // pred_check
      _
    $region23: #{run.1} parent=1 // pred_check_branch
      %68 = sbr.rel (0) target = $region25
    $region24: #{run.1} parent=1 // pred_region
      %s69 = sadd.s32 0, 0
      %p70 = scmp.lt.s32.totalorder %s69, 0
      %s71 = scalar_select %p70, %s69, 0
      %s72 = smul.addr %s71, 8
      %s73 = scalar_lea.vmem %s5, %s72
      %s74 = sadd.s32 0, 0
    $region25: #{run.1} parent=1 // pred_fallthru
      _
    // Predicated region
    $region26: #{run.1} parent=1 // pred_check
      _
    $region27: #{run.1} parent=1 // pred_check_branch
      %76 = sbr.rel (0) target = $region29
    $region28: #{run.1} parent=1 // pred_region
      %s77 = sadd.s32 0, 0
      %p78 = scmp.lt.s32.totalorder %s77, 0
      %s79 = scalar_select %p78, %s77, 0
      %s80 = smul.addr %s79, 8
      %s81 = scalar_lea.vmem %s6, %s80
      %s82 = sadd.s32 0, 0
    $region29: #{run.1} parent=1 // pred_fallthru
      _
    // Predicated region
    $region30: #{run.1} parent=1 // pred_check
      _
    $region31: #{run.1} parent=1 // pred_check_branch
      %84 = sbr.rel (0) target = $region33
    $region32: #{run.1} parent=1 // pred_region
      %s85 = sadd.s32 0, 0
      %s87 = ssub.s32 128, 128
      %88 = vsyncadd [#allocation5], %s87
      %s89 = smul.addr %s85, 128
      %s90 = scalar_lea.hbm %s7, %s89
      %s92 = sshll.u32 [#allocation4], 4
      %s93 = int_to_ptr.vmem [resolvable:$true] %s92
      %95 = dma.hbm_to_vmem [thread:$0]  %s90, 128, %s93, [#allocation5]
    $region33: #{run.1} parent=1 // pred_fallthru
      _
    // Predicated region
    $region34: #{run.1} parent=1 // pred_check
      _
    $region35: #{run.1} parent=1 // pred_check_branch
      %97 = sbr.rel (0) target = $region37
    $region36: #{run.1} parent=1 // pred_region
      %s98 = sadd.s32 0, 0
      %p99 = scmp.lt.s32.totalorder %s98, 0
      %s100 = scalar_select %p99, %s98, 0
      %s101 = smul.addr %s100, 8
      %s102 = scalar_lea.vmem %s8, %s101
      %s103 = sadd.s32 0, 0
    $region37: #{run.1} parent=1 // pred_fallthru
      _
    // Predicated region
    $region38: #{run.1} parent=1 // pred_check
      _
    $region39: #{run.1} parent=1 // pred_check_branch
      %105 = sbr.rel (0) target = $region41
    $region40: #{run.1} parent=1 // pred_region
      %s106 = sadd.s32 0, 0
      %s108 = ssub.s32 128, 128
      %109 = vsyncadd [#allocation7], %s108
      %s110 = smul.addr %s106, 128
      %s111 = scalar_lea.hbm %s9, %s110
      %s113 = sshll.u32 [#allocation6], 4
      %s114 = int_to_ptr.vmem [resolvable:$true] %s113
      %116 = dma.hbm_to_vmem [thread:$0]  %s111, 128, %s114, [#allocation7]
    $region41: #{run.1} parent=1 // pred_fallthru
      _
    // Predicated region
    $region42: #{run.1} parent=1 // pred_check
      _
    $region43: #{run.1} parent=1 // pred_check_branch
      %118 = sbr.rel (0) target = $region45
    $region44: #{run.1} parent=1 // pred_region
      %s119 = sadd.s32 0, 0
      %p120 = scmp.lt.s32.totalorder %s119, 0
      %s121 = scalar_select %p120, %s119, 0
      %s122 = smul.addr %s121, 8
      %s123 = scalar_lea.vmem %s10, %s122
      %s124 = sadd.s32 0, 0
    $region45: #{run.1} parent=1 // pred_fallthru
      _
    // Predicated region
    $region46: #{run.1} parent=1 // pred_check
      _
    $region47: #{run.1} parent=1 // pred_check_branch
      %126 = sbr.rel (0) target = $region49
    $region48: #{run.1} parent=1 // pred_region
      %s127 = sadd.s32 0, 0
      %s129 = ssub.s32 128, 128
      %130 = vsyncadd [#allocation7], %s129
      %s131 = smul.addr %s127, 128
      %s132 = scalar_lea.hbm %s11, %s131
      %s134 = sshll.u32 [#allocation8], 4
      %s135 = int_to_ptr.vmem [resolvable:$true] %s134
      %137 = dma.hbm_to_vmem [thread:$0]  %s132, 128, %s135, [#allocation7]
    $region49: #{run.1} parent=1 // pred_fallthru
      _
    // Predicated region
    $region50: #{run.1} parent=1 // pred_check
      _
    $region51: #{run.1} parent=1 // pred_check_branch
      %139 = sbr.rel (0) target = $region53
    $region52: #{run.1} parent=1 // pred_region
      %s140 = sadd.s32 0, 0
      %p141 = scmp.lt.s32.totalorder %s140, 0
      %s142 = scalar_select %p141, %s140, 0
      %s143 = smul.addr %s142, 8
      %s144 = scalar_lea.vmem %s12, %s143
      %s145 = sadd.s32 0, 0
    $region53: #{run.1} parent=1 // pred_fallthru
      _
    // Predicated region
    $region54: #{run.1} parent=1 // pred_check
      _
    $region55: #{run.1} parent=1 // pred_check_branch
      %147 = sbr.rel (0) target = $region57
    $region56: #{run.1} parent=1 // pred_region
      %s148 = sadd.s32 0, 0
      %s150 = ssub.s32 128, 128
      %151 = vsyncadd [#allocation10], %s150
      %s152 = smul.addr %s148, 128
      %s153 = scalar_lea.hbm %s13, %s152
      %s155 = sshll.u32 [#allocation9], 4
      %s156 = int_to_ptr.vmem [resolvable:$true] %s155
      %158 = dma.hbm_to_vmem [thread:$0]  %s153, 128, %s156, [#allocation10]
    $region57: #{run.1} parent=1 // pred_fallthru
      _
    // Predicated region
    $region58: #{run.1} parent=1 // pred_check
      _
    $region59: #{run.1} parent=1 // pred_check_branch
      %160 = sbr.rel (0) target = $region61
    $region60: #{run.1} parent=1 // pred_region
      %s161 = sadd.s32 0, 0
      %p162 = scmp.lt.s32.totalorder %s161, 0
      %s163 = scalar_select %p162, %s161, 0
      %s164 = smul.addr %s163, 8
      %s165 = scalar_lea.vmem %s14, %s164
      %s166 = sadd.s32 0, 0
    $region61: #{run.1} parent=1 // pred_fallthru
      _
    // Predicated region
    $region62: #{run.1} parent=1 // pred_check
      _
    $region63: #{run.1} parent=1 // pred_check_branch
      %168 = sbr.rel (0) target = $region65
    $region64: #{run.1} parent=1 // pred_region
      %s169 = sadd.s32 0, 0
      %s171 = ssub.s32 128, 128
      %172 = vsyncadd [#allocation10], %s171
      %s173 = smul.addr %s169, 128
      %s174 = scalar_lea.hbm %s15, %s173
      %s176 = sshll.u32 [#allocation11], 4
      %s177 = int_to_ptr.vmem [resolvable:$true] %s176
      %179 = dma.hbm_to_vmem [thread:$0]  %s174, 128, %s177, [#allocation10]
    $region65: #{run.1} parent=1 // pred_fallthru
      _
    // Predicated region
    $region66: #{run.1} parent=1 // pred_check
      _
    $region67: #{run.1} parent=1 // pred_check_branch
      %181 = sbr.rel (0) target = $region69
    $region68: #{run.1} parent=1 // pred_region
      %s182 = sadd.s32 0, 0
      %p183 = scmp.lt.s32.totalorder %s182, 0
      %s184 = scalar_select %p183, %s182, 0
      %s185 = smul.addr %s184, 8
      %s186 = scalar_lea.vmem %s16, %s185
      %s187 = sadd.s32 0, 0
    $region69: #{run.1} parent=1 // pred_fallthru
      _
    // Predicated region
    $region70: #{run.1} parent=1 // pred_check
      _
    $region71: #{run.1} parent=1 // pred_check_branch
      %189 = sbr.rel (0) target = $region73
    $region72: #{run.1} parent=1 // pred_region
      %s190 = sadd.s32 0, 0
      %s192 = ssub.s32 128, 128
      %193 = vsyncadd [#allocation13], %s192
      %s194 = smul.addr %s190, 128
      %s195 = scalar_lea.hbm %s17, %s194
      %s197 = sshll.u32 [#allocation12], 4
      %s198 = int_to_ptr.vmem [resolvable:$true] %s197
      %200 = dma.hbm_to_vmem [thread:$0]  %s195, 128, %s198, [#allocation13]
    $region73: #{run.1} parent=1 // pred_fallthru
      _
    // Predicated region
    $region74: #{run.1} parent=1 // pred_check
      _
    $region75: #{run.1} parent=1 // pred_check_branch
      %202 = sbr.rel (0) target = $region77
    $region76: #{run.1} parent=1 // pred_region
      %203 = dma.done [#allocation5], 128
    $region77: #{run.1} parent=1 // pred_fallthru
      _
    // Predicated region
    $region78: #{run.1} parent=1 // pred_check
      _
    $region79: #{run.1} parent=1 // pred_check_branch
      %205 = sbr.rel (0) target = $region81
    $region80: #{run.1} parent=1 // pred_region
      %206 = dma.done [#allocation7], 128
    $region81: #{run.1} parent=1 // pred_fallthru
      _
    // Predicated region
    $region82: #{run.1} parent=1 // pred_check
      _
    $region83: #{run.1} parent=1 // pred_check_branch
      %208 = sbr.rel (0) target = $region85
    $region84: #{run.1} parent=1 // pred_region
      %209 = dma.done [#allocation7], 128
    $region85: #{run.1} parent=1 // pred_fallthru
      _
    // Predicated region
    $region86: #{run.1} parent=1 // pred_check
      _
    $region87: #{run.1} parent=1 // pred_check_branch
      %211 = sbr.rel (0) target = $region89
    $region88: #{run.1} parent=1 // pred_region
      %212 = dma.done [#allocation10], 128
    $region89: #{run.1} parent=1 // pred_fallthru
      _
    // Predicated region
    $region90: #{run.1} parent=1 // pred_check
      _
    $region91: #{run.1} parent=1 // pred_check_branch
      %214 = sbr.rel (0) target = $region93
    $region92: #{run.1} parent=1 // pred_region
      %215 = dma.done [#allocation10], 128
    $region93: #{run.1} parent=1 // pred_fallthru
      _
    // Predicated region
    $region94: #{run.1} parent=1 // pred_check
      _
    $region95: #{run.1} parent=1 // pred_check_branch
      %217 = sbr.rel (0) target = $region97
    $region96: #{run.1} parent=1 // pred_region
      %218 = dma.done [#allocation13], 128
    $region97: #{run.1} parent=1 // pred_fallthru
      _
    %s219 = sadd.s32 0, 0
    %p220 = scmp.lt.s32.totalorder %s219, 0
    %s221 = scalar_select %p220, %s219, 0
    %s222 = smul.addr %s221, 8
    %s223 = scalar_lea.vmem %s0, %s222
    %s224 = sadd.s32 0, 0
    %p225 = scmp.lt.s32.totalorder %s224, 0
    %s226 = scalar_select %p225, %s224, 0
    %s227 = smul.addr %s226, 8
    %s228 = scalar_lea.vmem %s1, %s227
    %s229 = sadd.s32 0, 0
    %p230 = scmp.lt.s32.totalorder %s229, 0
    %s231 = scalar_select %p230, %s229, 0
    %s232 = smul.addr %s231, 8
    %s233 = scalar_lea.vmem %s2, %s232
    %s234 = sadd.s32 0, 0
    %p235 = scmp.lt.s32.totalorder %s234, 0
    %s236 = scalar_select %p235, %s234, 0
    %s237 = smul.addr %s236, 8
    %s238 = scalar_lea.vmem %s3, %s237
    %s239 = sadd.s32 0, 0
    %p240 = scmp.lt.s32.totalorder %s239, 0
    %s241 = scalar_select %p240, %s239, 0
    %s242 = smul.addr %s241, 8
    %s243 = scalar_lea.vmem %s4, %s242
    %s244 = sadd.s32 0, 0
    %p245 = scmp.lt.s32.totalorder %s244, 0
    %s246 = scalar_select %p245, %s244, 0
    %s247 = smul.addr %s246, 8
    %s248 = scalar_lea.vmem %s5, %s247
    %s249 = sadd.s32 0, 0
    %p250 = scmp.lt.s32.totalorder %s249, 0
    %s251 = scalar_select %p250, %s249, 0
    %s252 = smul.addr %s251, 8
    %s253 = scalar_lea.vmem %s6, %s252
    %s254 = sadd.s32 0, 0
    %p255 = scmp.lt.s32.totalorder %s254, 0
    %s256 = scalar_select %p255, %s254, 0
    %s257 = smul.addr %s256, 8
    %s258 = scalar_lea.vmem %s8, %s257
    %s259 = sadd.s32 0, 0
    %p260 = scmp.lt.s32.totalorder %s259, 0
    %s261 = scalar_select %p260, %s259, 0
    %s262 = smul.addr %s261, 8
    %s263 = scalar_lea.vmem %s10, %s262
    %s264 = sadd.s32 0, 0
    %p265 = scmp.lt.s32.totalorder %s264, 0
    %s266 = scalar_select %p265, %s264, 0
    %s267 = smul.addr %s266, 8
    %s268 = scalar_lea.vmem %s12, %s267
    %s269 = sadd.s32 0, 0
    %p270 = scmp.lt.s32.totalorder %s269, 0
    %s271 = scalar_select %p270, %s269, 0
    %s272 = smul.addr %s271, 8
    %s273 = scalar_lea.vmem %s14, %s272
    %s274 = sadd.s32 0, 0
    %p275 = scmp.lt.s32.totalorder %s274, 0
    %s276 = scalar_select %p275, %s274, 0
    %s277 = smul.addr %s276, 8
    %s278 = scalar_lea.vmem %s16, %s277
    %s279 = sadd.s32 0, 0
    %p280 = scmp.lt.s32.totalorder %s279, 0
    %s281 = scalar_select %p280, %s279, 0
    %s282 = smul.addr %s281, 8
    %s283 = scalar_lea.vmem %s0, %s282
    %s284 = sadd.s32 0, 0
    %s285 = sadd.s32 0, 0
    %p286 = scmp.lt.s32.totalorder %s285, 0
    %s287 = scalar_select %p286, %s285, 0
    %s288 = smul.addr %s287, 8
    %s289 = scalar_lea.vmem %s1, %s288
    %s290 = sadd.s32 0, 0
    %s291 = sadd.s32 0, 0
    %p292 = scmp.lt.s32.totalorder %s291, 0
    %s293 = scalar_select %p292, %s291, 0
    %s294 = smul.addr %s293, 8
    %s295 = scalar_lea.vmem %s2, %s294
    %s296 = sadd.s32 0, 0
    %s297 = sadd.s32 0, 0
    %p298 = scmp.lt.s32.totalorder %s297, 0
    %s299 = scalar_select %p298, %s297, 0
    %s300 = smul.addr %s299, 8
    %s301 = scalar_lea.vmem %s3, %s300
    %s302 = sadd.s32 0, 0
    %s303 = sadd.s32 0, 0
    %p304 = scmp.lt.s32.totalorder %s303, 0
    %s305 = scalar_select %p304, %s303, 0
    %s306 = smul.addr %s305, 8
    %s307 = scalar_lea.vmem %s4, %s306
    %s308 = sadd.s32 0, 0
    %s309 = sadd.s32 0, 0
    %p310 = scmp.lt.s32.totalorder %s309, 0
    %s311 = scalar_select %p310, %s309, 0
    %s312 = smul.addr %s311, 8
    %s313 = scalar_lea.vmem %s5, %s312
    %s314 = sadd.s32 0, 0
    %s315 = sadd.s32 0, 0
    %p316 = scmp.lt.s32.totalorder %s315, 0
    %s317 = scalar_select %p316, %s315, 0
    %s318 = smul.addr %s317, 8
    %s319 = scalar_lea.vmem %s6, %s318
    %s320 = sadd.s32 0, 0
    %s321 = sadd.s32 0, 0
    %s322 = sadd.s32 0, 0
    %p323 = scmp.lt.s32.totalorder %s322, 0
    %s324 = scalar_select %p323, %s322, 0
    %s325 = smul.addr %s324, 8
    %s326 = scalar_lea.vmem %s8, %s325
    %s327 = sadd.s32 0, 0
    %s328 = sadd.s32 0, 0
    %s329 = sadd.s32 0, 0
    %p330 = scmp.lt.s32.totalorder %s329, 0
    %s331 = scalar_select %p330, %s329, 0
    %s332 = smul.addr %s331, 8
    %s333 = scalar_lea.vmem %s10, %s332
    %s334 = sadd.s32 0, 0
    %s335 = sadd.s32 0, 0
    %s336 = sadd.s32 0, 0
    %p337 = scmp.lt.s32.totalorder %s336, 0
    %s338 = scalar_select %p337, %s336, 0
    %s339 = smul.addr %s338, 8
    %s340 = scalar_lea.vmem %s12, %s339
    %s341 = sadd.s32 0, 0
    %s342 = sadd.s32 0, 0
    %s343 = sadd.s32 0, 0
    %p344 = scmp.lt.s32.totalorder %s343, 0
    %s345 = scalar_select %p344, %s343, 0
    %s346 = smul.addr %s345, 8
    %s347 = scalar_lea.vmem %s14, %s346
    %s348 = sadd.s32 0, 0
    %s349 = sadd.s32 0, 0
    %s350 = sadd.s32 0, 0
    %p351 = scmp.lt.s32.totalorder %s350, 0
    %s352 = scalar_select %p351, %s350, 0
    %s353 = smul.addr %s352, 8
    %s354 = scalar_lea.vmem %s16, %s353
    %s355 = sadd.s32 0, 0
    %s356 = sadd.s32 0, 0
    %p357 = scmp.eq.s32.totalorder 0, 0
    // Predicated region
    $region98: #{run.1} parent=1 // pred_check
      %p358 = pneg %p357
    $region99: #{run.1} parent=1 // pred_check_branch
      %360 = sbr.rel (%p358) target = $region101
    $region100: #{run.1} parent=1 // pred_region
      %361 = vst [vmem:[#allocation2] sm:$0x7] 0.0
      %362 = vst [vmem:[#allocation3] sm:$0x7] 0.0
    $region101: #{run.1} parent=1 // pred_fallthru
      _
    %v363 = vld [vmem:[%s283] sm:$0xff]
    %v364 = vld [vmem:[%s301] sm:$0xff]
    %v365 = vld [vmem:[%s319] sm:$0xff]
    %v366 = vld [vmem:[#allocation6] sm:$0xff]
    %v367 = vld [vmem:[%s340] sm:$0xff]
    %v368 = vld [vmem:[#allocation11] sm:$0xff]
    %v369 = vsub.f32 %v363, %v365
    %v370 = vsub.f32 %v366, %v364
    %v371 = vadd.f32 %v369, %v370
    %v372 = vmax.f32 %v371, 0.0
    %v373 = vsub.f32 %v363, %v364
    %v374 = vmul.f32 %v373, %v373
    %v375 = vsub.f32 %v365, %v366
    %v376 = vmul.f32 %v375, %v375
    %v377 = vadd.f32 %v374, %v376
    %v378 = vsub.f32 %v367, %v368
    %v379 = vmul.f32 %v378, %v378
    %v380 = vadd.f32 %v377, %v379
    %v381 = vrsqrt.pop %v380
    %v382 = vmul.f32 %v380, %v381
    %vm383 = vcmp.eq.f32.partialorder %v380, inf
    %v384 = vsel %vm383, %v380, %v382
    %vm385 = vcmp.eq.f32.partialorder %v380, 0.0
    %v386 = vand.u32 %v380, 2147483648
    %v387 = vsel %vm385, %v386, %v384
    %v388 = vld [vmem:[#allocation2] sm:$0x1]
    %v389 = vrot.slane %v372, 4
    %v390 = vadd.f32 %v372, %v389
    %v391 = vrot.slane %v390, 2
    %v392 = vadd.f32 %v390, %v391
    %v393 = vrot.slane %v392, 1
    %v394 = vadd.f32 %v392, %v393
    %v395 = vadd.f32 %v388, %v394
    %396 = vst [vmem:[#allocation2] sm:$0x1] %v395
    %v397 = vld [vmem:[#allocation3] sm:$0x1]
    %v398 = vrot.slane %v387, 4
    %v399 = vadd.f32 %v387, %v398
    %v400 = vrot.slane %v399, 2
    %v401 = vadd.f32 %v399, %v400
    %v402 = vrot.slane %v401, 1
    %v403 = vadd.f32 %v401, %v402
    %v404 = vadd.f32 %v397, %v403
    %405 = vst [vmem:[#allocation3] sm:$0x1] %v404
    %v406 = vld [vmem:[%s289] sm:$0xff]
    %v407 = vld [vmem:[%s307] sm:$0xff]
    %v408 = vld [vmem:[#allocation4] sm:$0xff]
    %v409 = vld [vmem:[%s333] sm:$0xff]
    %v410 = vld [vmem:[#allocation9] sm:$0xff]
    %v411 = vld [vmem:[%s354] sm:$0xff]
    %v412 = vsub.f32 %v406, %v408
    %v413 = vsub.f32 %v409, %v407
    %v414 = vadd.f32 %v412, %v413
    %v415 = vmax.f32 %v414, 0.0
    %v416 = vsub.f32 %v406, %v407
    %v417 = vmul.f32 %v416, %v416
    %v418 = vsub.f32 %v408, %v409
    %v419 = vmul.f32 %v418, %v418
    %v420 = vadd.f32 %v417, %v419
    %v421 = vsub.f32 %v410, %v411
    %v422 = vmul.f32 %v421, %v421
    %v423 = vadd.f32 %v420, %v422
    %v424 = vrsqrt.pop %v423
    %v425 = vmul.f32 %v423, %v424
    %vm426 = vcmp.eq.f32.partialorder %v423, inf
    %v427 = vsel %vm426, %v423, %v425
    %vm428 = vcmp.eq.f32.partialorder %v423, 0.0
    %v429 = vand.u32 %v423, 2147483648
    %v430 = vsel %vm428, %v429, %v427
    %v431 = vld [vmem:[#allocation2 + $0x1] sm:$0x1]
    %v432 = vrot.slane %v415, 4
    %v433 = vadd.f32 %v415, %v432
    %v434 = vrot.slane %v433, 2
    %v435 = vadd.f32 %v433, %v434
    %v436 = vrot.slane %v435, 1
    %v437 = vadd.f32 %v435, %v436
    %v438 = vadd.f32 %v431, %v437
    %439 = vst [vmem:[#allocation2 + $0x1] sm:$0x1] %v438
    %v440 = vld [vmem:[#allocation3 + $0x1] sm:$0x1]
    %v441 = vrot.slane %v430, 4
    %v442 = vadd.f32 %v430, %v441
    %v443 = vrot.slane %v442, 2
    %v444 = vadd.f32 %v442, %v443
    %v445 = vrot.slane %v444, 1
    %v446 = vadd.f32 %v444, %v445
    %v447 = vadd.f32 %v440, %v446
    %448 = vst [vmem:[#allocation3 + $0x1] sm:$0x1] %v447
    %v449 = vld [vmem:[%s295] sm:$0xff]
    %v450 = vld [vmem:[%s313] sm:$0xff]
    %v451 = vld [vmem:[%s326] sm:$0xff]
    %v452 = vld [vmem:[#allocation8] sm:$0xff]
    %v453 = vld [vmem:[%s347] sm:$0xff]
    %v454 = vld [vmem:[#allocation12] sm:$0xff]
    %v455 = vsub.f32 %v449, %v451
    %v456 = vsub.f32 %v452, %v450
    %v457 = vadd.f32 %v455, %v456
    %v458 = vmax.f32 %v457, 0.0
    %v459 = vsub.f32 %v449, %v450
    %v460 = vmul.f32 %v459, %v459
    %v461 = vsub.f32 %v451, %v452
    %v462 = vmul.f32 %v461, %v461
    %v463 = vadd.f32 %v460, %v462
    %v464 = vsub.f32 %v453, %v454
    %v465 = vmul.f32 %v464, %v464
    %v466 = vadd.f32 %v463, %v465
    %v467 = vrsqrt.pop %v466
    %v468 = vmul.f32 %v466, %v467
    %vm469 = vcmp.eq.f32.partialorder %v466, inf
    %v470 = vsel %vm469, %v466, %v468
    %vm471 = vcmp.eq.f32.partialorder %v466, 0.0
    %v472 = vand.u32 %v466, 2147483648
    %v473 = vsel %vm471, %v472, %v470
    %v474 = vld [vmem:[#allocation2 + $0x2] sm:$0x1]
    %v475 = vrot.slane %v458, 4
    %v476 = vadd.f32 %v458, %v475
    %v477 = vrot.slane %v476, 2
    %v478 = vadd.f32 %v476, %v477
    %v479 = vrot.slane %v478, 1
    %v480 = vadd.f32 %v478, %v479
    %v481 = vadd.f32 %v474, %v480
    %482 = vst [vmem:[#allocation2 + $0x2] sm:$0x1] %v481
    %v483 = vld [vmem:[#allocation3 + $0x2] sm:$0x1]
    %v484 = vrot.slane %v473, 4
    %v485 = vadd.f32 %v473, %v484
    %v486 = vrot.slane %v485, 2
    %v487 = vadd.f32 %v485, %v486
    %v488 = vrot.slane %v487, 1
    %v489 = vadd.f32 %v487, %v488
    %v490 = vadd.f32 %v483, %v489
    %491 = vst [vmem:[#allocation3 + $0x2] sm:$0x1] %v490
    // Predicated region
    $region102: #{run.1} parent=1 // pred_check
      %p492 = pneg %p357
    $region103: #{run.1} parent=1 // pred_check_branch
      %494 = sbr.rel (%p492) target = $region105
    $region104: #{run.1} parent=1 // pred_region
      %v495 = vld [vmem:[#allocation2] sm:$0x7]
      %vm496 = vcmask 1042432
      %v497 = vsel %vm496, %v495, 0.0
      %498 = vadd.xlane.f32.xlu0 %v497
      %v499 = vpop.xlane.xlu0 %498
      %v500 = vld [vmem:[#allocation3] sm:$0x7]
      %v501 = vsel %vm496, %v500, 0.0
      %502 = vadd.xlane.f32.xlu0 %v501
      %v503 = vpop.xlane.xlu0 %502
      %v504 = vlaneseq
      %v505 = vand.u32 %v504, 127
      %vm506 = vcmp.eq.s32.totalorder %v505, 0
      %vm507 = vcmp.eq.s32.totalorder %v505, 1
      %v508 = vsel %vm507, %v503, 0.0
      %v509 = vsel %vm506, %v499, %v508
      %510 = vst [vmem:[%s18] sm:$0x7] %v509
    $region105: #{run.1} parent=1 // pred_fallthru
      _
    // Predicated region
    $region106: #{run.1} parent=1 // pred_check
      _
    $region107: #{run.1} parent=1 // pred_check_branch
      %512 = sbr.rel (0) target = $region109
    $region108: #{run.1} parent=1 // pred_region
      _
    $region109: #{run.1} parent=1 // pred_fallthru
      _
    // Predicated region
    $region110: #{run.1} parent=1 // pred_check
      _
    $region111: #{run.1} parent=1 // pred_check_branch
      %514 = sbr.rel (0) target = $region113
    $region112: #{run.1} parent=1 // pred_region
      _
    $region113: #{run.1} parent=1 // pred_fallthru
      _
    %515 = vsyncpa [#allocation5], 1
    %516 = vsyncpa [#allocation7], 1
    %517 = vsyncpa [#allocation10], 1
    %518 = vsyncpa [#allocation13], 1

</llo_original>
